<compile_context>
chip_gen: v5e
topology: v5e:2x2
jax: 0.10.0
libtpu: 0.0.40
codegen_flags: <defaults>
</compile_context>

<pallas_src>
import jax
import jax.numpy as jnp
import numpy as np
from jax.experimental import pallas as pl
from jax.experimental.pallas import tpu as pltpu

HIDDEN = 64      # hidden width of att_res_mlp_LN2
EPS = 1e-5       # nn.LayerNorm default eps


# ----------------------------------------------------------------------------
# Kernel
# ----------------------------------------------------------------------------
def att_res_mlp_ln2_kernel(
    x_ref, y_ref,
    q_w, q_b, k_w, k_b, v_w, v_b,
    m_w1x, m_w1o, m_b1, m_w2t, m_b2,
    out_ref,
):
    x = x_ref[...].astype(jnp.float32)          # [TB, C1] appearance features
    y = y_ref[...].astype(jnp.float32)          # [TB, C2] pose features

    # LayerNorm without affine (gamma/beta already folded into the weights).
    def _norm(z):
        mu = jnp.mean(z, axis=-1, keepdims=True)
        d = z - mu
        var = jnp.mean(d * d, axis=-1, keepdims=True)
        return d * jax.lax.rsqrt(var + EPS)

    x_hat = _norm(x)
    y_hat = _norm(y)                            # shared by k and v branches

    q = jnp.dot(x_hat, q_w[...], preferred_element_type=jnp.float32) + q_b[...]
    k = jnp.dot(y_hat, k_w[...], preferred_element_type=jnp.float32) + k_b[...]
    v = jnp.dot(y_hat, v_w[...], preferred_element_type=jnp.float32) + v_b[...]

    o = jax.nn.sigmoid(q * k) * v               # [TB, H] cross-modal gated value

    # LayerNorm over the *virtual* concat [x, o] via combined partial moments
    # (no lane-axis concatenate / relayout).
    c1 = x.shape[-1]
    h = o.shape[-1]
    n = float(c1 + h)
    mean = (jnp.sum(x, axis=-1, keepdims=True)
            + jnp.sum(o, axis=-1, keepdims=True)) / n
    dx = x - mean
    do_ = o - mean
    var = (jnp.sum(dx * dx, axis=-1, keepdims=True)
           + jnp.sum(do_ * do_, axis=-1, keepdims=True)) / n
    inv = jax.lax.rsqrt(var + EPS)
    x2 = dx * inv
    o2 = do_ * inv

    # Split first MLP matmul across the two concat halves.
    hdn = jnp.dot(x2, m_w1x[...], preferred_element_type=jnp.float32)
    hdn = hdn + jnp.dot(o2, m_w1o[...], preferred_element_type=jnp.float32)
    hdn = jnp.maximum(hdn + m_b1[...], 0.0)
    # Dropout(p=0.5) in eval mode is the identity.
    # TODO(synk): training-mode dropout would need pltpu.prng_seed/prng_random_bits.

    out_c = out_ref.shape[-1]
    if out_c == 1:
        # Degenerate N=1 matmul -> VPU multiply + XLU lane reduction.
        out = jnp.sum(hdn * m_w2t[...], axis=-1, keepdims=True) + m_b2[...]
    else:
        out = jax.lax.dot_general(
            hdn, m_w2t[...], (((1,), (1,)), ((), ())),
            preferred_element_type=jnp.float32) + m_b2[...]
    out_ref[...] = out.astype(out_ref.dtype)


_FOLDED_ORDER = ("q_w", "q_b", "k_w", "k_b", "v_w", "v_b",
                 "m_w1x", "m_w1o", "m_b1", "m_w2t", "m_b2")


# ----------------------------------------------------------------------------
# Parameters
# ----------------------------------------------------------------------------
def init_params(key, in_c1, in_c2, out_c, hidden=HIDDEN):
    """Unfused PyTorch-style parameters (LN gamma/beta + Linear [in,out] W, b)."""
    ks = jax.random.split(key, 16)

    def lin(kw, kb, fan_in, fan_out):
        bound = 1.0 / np.sqrt(fan_in)
        w = jax.random.uniform(kw, (fan_in, fan_out), jnp.float32, -bound, bound)
        b = jax.random.uniform(kb, (1, fan_out), jnp.float32, -bound, bound)
        return w, b

    p = {}
    p["q_ln_g"], p["q_ln_b"] = jnp.ones((1, in_c1)), jnp.zeros((1, in_c1))
    p["k_ln_g"], p["k_ln_b"] = jnp.ones((1, in_c2)), jnp.zeros((1, in_c2))
    p["v_ln_g"], p["v_ln_b"] = jnp.ones((1, in_c2)), jnp.zeros((1, in_c2))
    p["q_w"], p["q_b"] = lin(ks[0], ks[1], in_c1, hidden)
    p["k_w"], p["k_b"] = lin(ks[2], ks[3], in_c2, hidden)
    p["v_w"], p["v_b"] = lin(ks[4], ks[5], in_c2, hidden)
    cat_c = in_c1 + hidden
    p["m_ln_g"], p["m_ln_b"] = jnp.ones((1, cat_c)), jnp.zeros((1, cat_c))
    p["m_w1"], p["m_b1"] = lin(ks[6], ks[7], cat_c, hidden)
    p["m_w2"], p["m_b2"] = lin(ks[8], ks[9], hidden, out_c)
    # Make LN affines non-trivial so the folding math is actually exercised.
    p["q_ln_g"] = p["q_ln_g"] * 1.1
    p["q_ln_b"] = p["q_ln_b"] + 0.05
    p["k_ln_g"] = p["k_ln_g"] * 0.9
    p["k_ln_b"] = p["k_ln_b"] - 0.03
    p["v_ln_g"] = p["v_ln_g"] * 1.05
    p["v_ln_b"] = p["v_ln_b"] + 0.02
    p["m_ln_g"] = p["m_ln_g"] * 0.95
    p["m_ln_b"] = p["m_ln_b"] + 0.01
    return p


def fold_params(p, in_c1):
    """Fold LN gamma/beta into the adjacent Linear weights/biases; split m_w1."""
    f = {}
    # LN(x)*g + b followed by @W + bias == x_hat @ (g[:,None]*W) + (b@W + bias)
    f["q_w"] = p["q_ln_g"].reshape(-1, 1) * p["q_w"]
    f["q_b"] = p["q_ln_b"] @ p["q_w"] + p["q_b"]
    f["k_w"] = p["k_ln_g"].reshape(-1, 1) * p["k_w"]
    f["k_b"] = p["k_ln_b"] @ p["k_w"] + p["k_b"]
    f["v_w"] = p["v_ln_g"].reshape(-1, 1) * p["v_w"]
    f["v_b"] = p["v_ln_b"] @ p["v_w"] + p["v_b"]
    # cat-LN affine folded into the (split) first MLP weight.
    w1 = p["m_w1"]
    g = p["m_ln_g"].reshape(-1, 1)
    f["m_w1x"] = g[:in_c1] * w1[:in_c1]
    f["m_w1o"] = g[in_c1:] * w1[in_c1:]
    f["m_b1"] = p["m_ln_b"] @ w1 + p["m_b1"]
    # Final projection stored transposed as [out_c, H].
    f["m_w2t"] = p["m_w2"].T
    f["m_b2"] = p["m_b2"]
    return f


# ----------------------------------------------------------------------------
# Wrapper
# ----------------------------------------------------------------------------
def _round_up(a, m):
    return (a + m - 1) // m * m


@jax.jit
def abstract_quality_classifier(features_2d, pose_2d, folded):
    B, c1 = features_2d.shape
    _, c2 = pose_2d.shape
    out_c = folded["m_b2"].shape[-1]

    # Batch tiling: pad to a multiple of the batch tile, one "parallel" grid axis.
    TB = min(512, _round_up(B, 8))
    B_pad = _round_up(B, TB)
    if B_pad != B:
        features_2d = jnp.pad(features_2d, ((0, B_pad - B), (0, 0)))
        pose_2d = jnp.pad(pose_2d, ((0, B_pad - B), (0, 0)))

    plist = [folded[n] for n in _FOLDED_ORDER]

    def const_spec(shape):
        # Full-array block, same block every grid step -> stays VMEM-resident.
        return pl.BlockSpec(shape, lambda i: (0, 0))

    in_specs = [pl.BlockSpec((TB, c1), lambda i: (i, 0)),
                pl.BlockSpec((TB, c2), lambda i: (i, 0))]
    in_specs += [const_spec(w.shape) for w in plist]

    out = pl.pallas_call(
        att_res_mlp_ln2_kernel,
        out_shape=jax.ShapeDtypeStruct((B_pad, out_c), jnp.float32),
        grid=(B_pad // TB,),
        in_specs=in_specs,
        out_specs=pl.BlockSpec((TB, out_c), lambda i: (i, 0)),
        compiler_params=pltpu.CompilerParams(
            dimension_semantics=("parallel",)),
    )(features_2d, pose_2d, *plist)
    return out[:B]


# ----------------------------------------------------------------------------
# Pure-JAX reference (mirrors the PyTorch forward in eval mode, UNFUSED params)
# ----------------------------------------------------------------------------
def reference_forward(features_2d, pose_2d, params):
    ln = lambda z, g, b: (z - z.mean(-1, keepdims=True)) * jax.lax.rsqrt(
        z.var(-1, keepdims=True) + EPS) * g + b
    q = ln(features_2d, params["q_ln_g"], params["q_ln_b"]) @ params["q_w"] + params["q_b"]
    k = ln(pose_2d, params["k_ln_g"], params["k_ln_b"]) @ params["k_w"] + params["k_b"]
    v = ln(pose_2d, params["v_ln_g"], params["v_ln_b"]) @ params["v_w"] + params["v_b"]
    o = jax.nn.sigmoid(q * k) * v
    cat = jnp.concatenate([features_2d, o], axis=-1)
    h = ln(cat, params["m_ln_g"], params["m_ln_b"])
    h = jax.nn.relu(h @ params["m_w1"] + params["m_b1"])
    return h @ params["m_w2"] + params["m_b2"]


if __name__ == "__main__":
    B, IN_C1, IN_C2, OUT_C = 8, 64, 32, 1

    key = jax.random.PRNGKey(0)
    k_feat, k_pose, k_par = jax.random.split(key, 3)
    features_2d = jax.random.normal(k_feat, (B, IN_C1), jnp.float32)
    pose_2d = jax.random.normal(k_pose, (B, IN_C2), jnp.float32)

    params = init_params(k_par, IN_C1, IN_C2, OUT_C)
    folded = fold_params(params, IN_C1)

    out = abstract_quality_classifier(features_2d, pose_2d, folded)
    out = jax.block_until_ready(out)

    ref = reference_forward(features_2d, pose_2d, params)
    np.testing.assert_allclose(np.asarray(out), np.asarray(ref), rtol=1e-5, atol=1e-5)

    print("KERNEL_OK")
</pallas_src>

<mosaic_0001>
module attributes {stable_mosaic.version = 11 : i64} {
  func.func @att_res_mlp_ln2_kernel(%arg0: i32, %arg1: memref<8x64xf32, #tpu.memory_space<vmem>>, %arg2: memref<8x32xf32, #tpu.memory_space<vmem>>, %arg3: memref<64x64xf32, #tpu.memory_space<vmem>>, %arg4: memref<1x64xf32, #tpu.memory_space<vmem>>, %arg5: memref<32x64xf32, #tpu.memory_space<vmem>>, %arg6: memref<1x64xf32, #tpu.memory_space<vmem>>, %arg7: memref<32x64xf32, #tpu.memory_space<vmem>>, %arg8: memref<1x64xf32, #tpu.memory_space<vmem>>, %arg9: memref<64x64xf32, #tpu.memory_space<vmem>>, %arg10: memref<64x64xf32, #tpu.memory_space<vmem>>, %arg11: memref<1x64xf32, #tpu.memory_space<vmem>>, %arg12: memref<1x64xf32, #tpu.memory_space<vmem>>, %arg13: memref<1x1xf32, #tpu.memory_space<vmem>>, %arg14: memref<8x1xf32, #tpu.memory_space<vmem>>) attributes {dimension_semantics = [#tpu.dimension_semantics<parallel>], iteration_bounds = array<i64: 1>, scalar_prefetch = 0 : i64, scratch_operands = 0 : i64, tpu.core_type = #tpu.core_type<tc>, window_params = [{transform_indices = @transform_0, window_bounds = array<i64: 8, 64>}, {transform_indices = @transform_1, window_bounds = array<i64: 8, 32>}, {pipeline_mode = #tpu.pipeline_mode<synchronous>, transform_indices = @transform_2, window_bounds = array<i64: 64, 64>}, {pipeline_mode = #tpu.pipeline_mode<synchronous>, transform_indices = @transform_3, window_bounds = array<i64: 1, 64>}, {pipeline_mode = #tpu.pipeline_mode<synchronous>, transform_indices = @transform_4, window_bounds = array<i64: 32, 64>}, {pipeline_mode = #tpu.pipeline_mode<synchronous>, transform_indices = @transform_5, window_bounds = array<i64: 1, 64>}, {pipeline_mode = #tpu.pipeline_mode<synchronous>, transform_indices = @transform_6, window_bounds = array<i64: 32, 64>}, {pipeline_mode = #tpu.pipeline_mode<synchronous>, transform_indices = @transform_7, window_bounds = array<i64: 1, 64>}, {pipeline_mode = #tpu.pipeline_mode<synchronous>, transform_indices = @transform_8, window_bounds = array<i64: 64, 64>}, {pipeline_mode = #tpu.pipeline_mode<synchronous>, transform_indices = @transform_9, window_bounds = array<i64: 64, 64>}, {pipeline_mode = #tpu.pipeline_mode<synchronous>, transform_indices = @transform_10, window_bounds = array<i64: 1, 64>}, {pipeline_mode = #tpu.pipeline_mode<synchronous>, transform_indices = @transform_11, window_bounds = array<i64: 1, 64>}, {pipeline_mode = #tpu.pipeline_mode<synchronous>, transform_indices = @transform_12, window_bounds = array<i64: 1, 1>}, {transform_indices = @transform_13, window_bounds = array<i64: 8, 1>}]} {
    %c0 = arith.constant 0 : index
    %c0_0 = arith.constant 0 : index
    %0 = vector.load %arg1[%c0, %c0_0] : memref<8x64xf32, #tpu.memory_space<vmem>>, vector<8x64xf32>
    %c0_1 = arith.constant 0 : index
    %c0_2 = arith.constant 0 : index
    %1 = vector.load %arg2[%c0_1, %c0_2] : memref<8x32xf32, #tpu.memory_space<vmem>>, vector<8x32xf32>
    %cst = arith.constant dense<0.000000e+00> : vector<8xf32>
    %2 = vector.multi_reduction <add>, %0, %cst [1] : vector<8x64xf32> to vector<8xf32>
    %3 = vector.shape_cast %2 : vector<8xf32> to vector<8x1xf32>
    %cst_3 = arith.constant 6.400000e+01 : f32
    %4 = vector.broadcast %cst_3 : f32 to vector<8x1xf32>
    %5 = arith.divf %3, %4 : vector<8x1xf32>
    %6 = vector.broadcast %5 : vector<8x1xf32> to vector<8x64xf32>
    %7 = arith.subf %0, %6 : vector<8x64xf32>
    %8 = arith.mulf %7, %7 : vector<8x64xf32>
    %cst_4 = arith.constant dense<0.000000e+00> : vector<8xf32>
    %9 = vector.multi_reduction <add>, %8, %cst_4 [1] : vector<8x64xf32> to vector<8xf32>
    %10 = vector.shape_cast %9 : vector<8xf32> to vector<8x1xf32>
    %cst_5 = arith.constant 6.400000e+01 : f32
    %11 = vector.broadcast %cst_5 : f32 to vector<8x1xf32>
    %12 = arith.divf %10, %11 : vector<8x1xf32>
    %cst_6 = arith.constant 9.99999974E-6 : f32
    %13 = vector.broadcast %cst_6 : f32 to vector<8x1xf32>
    %14 = arith.addf %12, %13 : vector<8x1xf32>
    %15 = math.rsqrt %14 : vector<8x1xf32>
    %16 = vector.broadcast %15 : vector<8x1xf32> to vector<8x64xf32>
    %17 = arith.mulf %7, %16 : vector<8x64xf32>
    %cst_7 = arith.constant dense<0.000000e+00> : vector<8xf32>
    %18 = vector.multi_reduction <add>, %1, %cst_7 [1] : vector<8x32xf32> to vector<8xf32>
    %19 = vector.shape_cast %18 : vector<8xf32> to vector<8x1xf32>
    %cst_8 = arith.constant 3.200000e+01 : f32
    %20 = vector.broadcast %cst_8 : f32 to vector<8x1xf32>
    %21 = arith.divf %19, %20 : vector<8x1xf32>
    %22 = vector.broadcast %21 : vector<8x1xf32> to vector<8x32xf32>
    %23 = arith.subf %1, %22 : vector<8x32xf32>
    %24 = arith.mulf %23, %23 : vector<8x32xf32>
    %cst_9 = arith.constant dense<0.000000e+00> : vector<8xf32>
    %25 = vector.multi_reduction <add>, %24, %cst_9 [1] : vector<8x32xf32> to vector<8xf32>
    %26 = vector.shape_cast %25 : vector<8xf32> to vector<8x1xf32>
    %cst_10 = arith.constant 3.200000e+01 : f32
    %27 = vector.broadcast %cst_10 : f32 to vector<8x1xf32>
    %28 = arith.divf %26, %27 : vector<8x1xf32>
    %cst_11 = arith.constant 9.99999974E-6 : f32
    %29 = vector.broadcast %cst_11 : f32 to vector<8x1xf32>
    %30 = arith.addf %28, %29 : vector<8x1xf32>
    %31 = math.rsqrt %30 : vector<8x1xf32>
    %32 = vector.broadcast %31 : vector<8x1xf32> to vector<8x32xf32>
    %33 = arith.mulf %23, %32 : vector<8x32xf32>
    %c0_12 = arith.constant 0 : index
    %c0_13 = arith.constant 0 : index
    %34 = vector.load %arg3[%c0_12, %c0_13] : memref<64x64xf32, #tpu.memory_space<vmem>>, vector<64x64xf32>
    %cst_14 = arith.constant dense<0.000000e+00> : vector<8x64xf32>
    %35 = tpu.matmul %17, %34, %cst_14 {dimension_numbers = #tpu.dot_dimension_numbers<[1], [0], [0], [1], [0, 0, 1, 1], [], []>} : vector<8x64xf32>, vector<64x64xf32>, vector<8x64xf32> -> vector<8x64xf32>
    %c0_15 = arith.constant 0 : index
    %c0_16 = arith.constant 0 : index
    %36 = vector.load %arg4[%c0_15, %c0_16] : memref<1x64xf32, #tpu.memory_space<vmem>>, vector<1x64xf32>
    %37 = vector.broadcast %36 : vector<1x64xf32> to vector<8x64xf32>
    %38 = arith.addf %35, %37 : vector<8x64xf32>
    %c0_17 = arith.constant 0 : index
    %c0_18 = arith.constant 0 : index
    %39 = vector.load %arg5[%c0_17, %c0_18] : memref<32x64xf32, #tpu.memory_space<vmem>>, vector<32x64xf32>
    %cst_19 = arith.constant dense<0.000000e+00> : vector<8x64xf32>
    %40 = tpu.matmul %33, %39, %cst_19 {dimension_numbers = #tpu.dot_dimension_numbers<[1], [0], [0], [1], [0, 0, 1, 1], [], []>} : vector<8x32xf32>, vector<32x64xf32>, vector<8x64xf32> -> vector<8x64xf32>
    %c0_20 = arith.constant 0 : index
    %c0_21 = arith.constant 0 : index
    %41 = vector.load %arg6[%c0_20, %c0_21] : memref<1x64xf32, #tpu.memory_space<vmem>>, vector<1x64xf32>
    %42 = vector.broadcast %41 : vector<1x64xf32> to vector<8x64xf32>
    %43 = arith.addf %40, %42 : vector<8x64xf32>
    %c0_22 = arith.constant 0 : index
    %c0_23 = arith.constant 0 : index
    %44 = vector.load %arg7[%c0_22, %c0_23] : memref<32x64xf32, #tpu.memory_space<vmem>>, vector<32x64xf32>
    %cst_24 = arith.constant dense<0.000000e+00> : vector<8x64xf32>
    %45 = tpu.matmul %33, %44, %cst_24 {dimension_numbers = #tpu.dot_dimension_numbers<[1], [0], [0], [1], [0, 0, 1, 1], [], []>} : vector<8x32xf32>, vector<32x64xf32>, vector<8x64xf32> -> vector<8x64xf32>
    %c0_25 = arith.constant 0 : index
    %c0_26 = arith.constant 0 : index
    %46 = vector.load %arg8[%c0_25, %c0_26] : memref<1x64xf32, #tpu.memory_space<vmem>>, vector<1x64xf32>
    %47 = vector.broadcast %46 : vector<1x64xf32> to vector<8x64xf32>
    %48 = arith.addf %45, %47 : vector<8x64xf32>
    %49 = arith.mulf %38, %43 : vector<8x64xf32>
    %50 = arith.negf %49 : vector<8x64xf32>
    %51 = math.exp %50 : vector<8x64xf32>
    %cst_27 = arith.constant 1.000000e+00 : f32
    %52 = vector.broadcast %cst_27 : f32 to vector<8x64xf32>
    %53 = arith.addf %52, %51 : vector<8x64xf32>
    %54 = arith.divf %52, %53 : vector<8x64xf32>
    %55 = arith.mulf %54, %48 : vector<8x64xf32>
    %cst_28 = arith.constant dense<0.000000e+00> : vector<8xf32>
    %56 = vector.multi_reduction <add>, %0, %cst_28 [1] : vector<8x64xf32> to vector<8xf32>
    %57 = vector.shape_cast %56 : vector<8xf32> to vector<8x1xf32>
    %cst_29 = arith.constant dense<0.000000e+00> : vector<8xf32>
    %58 = vector.multi_reduction <add>, %55, %cst_29 [1] : vector<8x64xf32> to vector<8xf32>
    %59 = vector.shape_cast %58 : vector<8xf32> to vector<8x1xf32>
    %60 = arith.addf %57, %59 : vector<8x1xf32>
    %cst_30 = arith.constant 1.280000e+02 : f32
    %61 = vector.broadcast %cst_30 : f32 to vector<8x1xf32>
    %62 = arith.divf %60, %61 : vector<8x1xf32>
    %63 = vector.broadcast %62 : vector<8x1xf32> to vector<8x64xf32>
    %64 = arith.subf %0, %63 : vector<8x64xf32>
    %65 = vector.broadcast %62 : vector<8x1xf32> to vector<8x64xf32>
    %66 = arith.subf %55, %65 : vector<8x64xf32>
    %67 = arith.mulf %64, %64 : vector<8x64xf32>
    %cst_31 = arith.constant dense<0.000000e+00> : vector<8xf32>
    %68 = vector.multi_reduction <add>, %67, %cst_31 [1] : vector<8x64xf32> to vector<8xf32>
    %69 = vector.shape_cast %68 : vector<8xf32> to vector<8x1xf32>
    %70 = arith.mulf %66, %66 : vector<8x64xf32>
    %cst_32 = arith.constant dense<0.000000e+00> : vector<8xf32>
    %71 = vector.multi_reduction <add>, %70, %cst_32 [1] : vector<8x64xf32> to vector<8xf32>
    %72 = vector.shape_cast %71 : vector<8xf32> to vector<8x1xf32>
    %73 = arith.addf %69, %72 : vector<8x1xf32>
    %cst_33 = arith.constant 1.280000e+02 : f32
    %74 = vector.broadcast %cst_33 : f32 to vector<8x1xf32>
    %75 = arith.divf %73, %74 : vector<8x1xf32>
    %cst_34 = arith.constant 9.99999974E-6 : f32
    %76 = vector.broadcast %cst_34 : f32 to vector<8x1xf32>
    %77 = arith.addf %75, %76 : vector<8x1xf32>
    %78 = math.rsqrt %77 : vector<8x1xf32>
    %79 = vector.broadcast %78 : vector<8x1xf32> to vector<8x64xf32>
    %80 = arith.mulf %64, %79 : vector<8x64xf32>
    %81 = vector.broadcast %78 : vector<8x1xf32> to vector<8x64xf32>
    %82 = arith.mulf %66, %81 : vector<8x64xf32>
    %c0_35 = arith.constant 0 : index
    %c0_36 = arith.constant 0 : index
    %83 = vector.load %arg9[%c0_35, %c0_36] : memref<64x64xf32, #tpu.memory_space<vmem>>, vector<64x64xf32>
    %cst_37 = arith.constant dense<0.000000e+00> : vector<8x64xf32>
    %84 = tpu.matmul %80, %83, %cst_37 {dimension_numbers = #tpu.dot_dimension_numbers<[1], [0], [0], [1], [0, 0, 1, 1], [], []>} : vector<8x64xf32>, vector<64x64xf32>, vector<8x64xf32> -> vector<8x64xf32>
    %c0_38 = arith.constant 0 : index
    %c0_39 = arith.constant 0 : index
    %85 = vector.load %arg10[%c0_38, %c0_39] : memref<64x64xf32, #tpu.memory_space<vmem>>, vector<64x64xf32>
    %cst_40 = arith.constant dense<0.000000e+00> : vector<8x64xf32>
    %86 = tpu.matmul %82, %85, %cst_40 {dimension_numbers = #tpu.dot_dimension_numbers<[1], [0], [0], [1], [0, 0, 1, 1], [], []>} : vector<8x64xf32>, vector<64x64xf32>, vector<8x64xf32> -> vector<8x64xf32>
    %87 = arith.addf %84, %86 : vector<8x64xf32>
    %c0_41 = arith.constant 0 : index
    %c0_42 = arith.constant 0 : index
    %88 = vector.load %arg11[%c0_41, %c0_42] : memref<1x64xf32, #tpu.memory_space<vmem>>, vector<1x64xf32>
    %89 = vector.broadcast %88 : vector<1x64xf32> to vector<8x64xf32>
    %90 = arith.addf %87, %89 : vector<8x64xf32>
    %cst_43 = arith.constant 0.000000e+00 : f32
    %91 = vector.broadcast %cst_43 : f32 to vector<8x64xf32>
    %92 = arith.maximumf %90, %91 : vector<8x64xf32>
    %c0_44 = arith.constant 0 : index
    %c0_45 = arith.constant 0 : index
    %93 = vector.load %arg12[%c0_44, %c0_45] : memref<1x64xf32, #tpu.memory_space<vmem>>, vector<1x64xf32>
    %94 = vector.broadcast %93 : vector<1x64xf32> to vector<8x64xf32>
    %95 = arith.mulf %92, %94 : vector<8x64xf32>
    %cst_46 = arith.constant dense<0.000000e+00> : vector<8xf32>
    %96 = vector.multi_reduction <add>, %95, %cst_46 [1] : vector<8x64xf32> to vector<8xf32>
    %97 = vector.shape_cast %96 : vector<8xf32> to vector<8x1xf32>
    %c0_47 = arith.constant 0 : index
    %c0_48 = arith.constant 0 : index
    %98 = vector.load %arg13[%c0_47, %c0_48] : memref<1x1xf32, #tpu.memory_space<vmem>>, vector<1x1xf32>
    %99 = vector.broadcast %98 : vector<1x1xf32> to vector<8x1xf32>
    %100 = arith.addf %97, %99 : vector<8x1xf32>
    %c0_49 = arith.constant 0 : index
    %c0_50 = arith.constant 0 : index
    %101 = vector.load %arg14[%c0_49, %c0_50] : memref<8x1xf32, #tpu.memory_space<vmem>>, vector<8x1xf32>
    tpu.vector_store %arg14[%c0_49, %c0_50], %100 {strides = array<i32>} : memref<8x1xf32, #tpu.memory_space<vmem>>, vector<8x1xf32>,
    return
  }
  func.func @transform_0(%arg0: i32) -> (i32, i32) {
    %c0_i32 = arith.constant 0 : i32
    %c0_i32_0 = arith.constant 0 : i32
    return %arg0, %c0_i32 : i32, i32
  }
  func.func @transform_1(%arg0: i32) -> (i32, i32) {
    %c0_i32 = arith.constant 0 : i32
    %c0_i32_0 = arith.constant 0 : i32
    return %arg0, %c0_i32 : i32, i32
  }
  func.func @transform_2(%arg0: i32) -> (i32, i32) {
    %c0_i32 = arith.constant 0 : i32
    %c0_i32_0 = arith.constant 0 : i32
    %c0_i32_1 = arith.constant 0 : i32
    return %c0_i32, %c0_i32_0 : i32, i32
  }
  func.func @transform_3(%arg0: i32) -> (i32, i32) {
    %c0_i32 = arith.constant 0 : i32
    %c0_i32_0 = arith.constant 0 : i32
    %c0_i32_1 = arith.constant 0 : i32
    return %c0_i32, %c0_i32_0 : i32, i32
  }
  func.func @transform_4(%arg0: i32) -> (i32, i32) {
    %c0_i32 = arith.constant 0 : i32
    %c0_i32_0 = arith.constant 0 : i32
    %c0_i32_1 = arith.constant 0 : i32
    return %c0_i32, %c0_i32_0 : i32, i32
  }
  func.func @transform_5(%arg0: i32) -> (i32, i32) {
    %c0_i32 = arith.constant 0 : i32
    %c0_i32_0 = arith.constant 0 : i32
    %c0_i32_1 = arith.constant 0 : i32
    return %c0_i32, %c0_i32_0 : i32, i32
  }
  func.func @transform_6(%arg0: i32) -> (i32, i32) {
    %c0_i32 = arith.constant 0 : i32
    %c0_i32_0 = arith.constant 0 : i32
    %c0_i32_1 = arith.constant 0 : i32
    return %c0_i32, %c0_i32_0 : i32, i32
  }
  func.func @transform_7(%arg0: i32) -> (i32, i32) {
    %c0_i32 = arith.constant 0 : i32
    %c0_i32_0 = arith.constant 0 : i32
    %c0_i32_1 = arith.constant 0 : i32
    return %c0_i32, %c0_i32_0 : i32, i32
  }
  func.func @transform_8(%arg0: i32) -> (i32, i32) {
    %c0_i32 = arith.constant 0 : i32
    %c0_i32_0 = arith.constant 0 : i32
    %c0_i32_1 = arith.constant 0 : i32
    return %c0_i32, %c0_i32_0 : i32, i32
  }
  func.func @transform_9(%arg0: i32) -> (i32, i32) {
    %c0_i32 = arith.constant 0 : i32
    %c0_i32_0 = arith.constant 0 : i32
    %c0_i32_1 = arith.constant 0 : i32
    return %c0_i32, %c0_i32_0 : i32, i32
  }
  func.func @transform_10(%arg0: i32) -> (i32, i32) {
    %c0_i32 = arith.constant 0 : i32
    %c0_i32_0 = arith.constant 0 : i32
    %c0_i32_1 = arith.constant 0 : i32
    return %c0_i32, %c0_i32_0 : i32, i32
  }
  func.func @transform_11(%arg0: i32) -> (i32, i32) {
    %c0_i32 = arith.constant 0 : i32
    %c0_i32_0 = arith.constant 0 : i32
    %c0_i32_1 = arith.constant 0 : i32
    return %c0_i32, %c0_i32_0 : i32, i32
  }
  func.func @transform_12(%arg0: i32) -> (i32, i32) {
    %c0_i32 = arith.constant 0 : i32
    %c0_i32_0 = arith.constant 0 : i32
    %c0_i32_1 = arith.constant 0 : i32
    return %c0_i32, %c0_i32_0 : i32, i32
  }
  func.func @transform_13(%arg0: i32) -> (i32, i32) {
    %c0_i32 = arith.constant 0 : i32
    %c0_i32_0 = arith.constant 0 : i32
    return %arg0, %c0_i32 : i32, i32
  }
}

</mosaic_0001>

<llo_original>
// kernel: abstract_quality_classifier.1
$region0: #{abstract_quality_classifier.1}
  #allocation0 [shape = 'u32[]', space=smem, size = 0x4, offset = 0x4, fixed_abs, tag = 'smem constant byte address 0x4 - core index']
  #allocation1 [shape = 'u32[72,128]{1,0:T(1,128)}', space=vmem, size = 0x9000, scoped, tag = 'internal scratch']
  #allocation2 [shape = 'f32[1,1]{1,0:T(1,128)S(1)}', space=vmem, size = 0x200, scoped, tag = 'scoped memory for abstract_quality_classifier.1']
  %s0 = inlined_call_operand.hbm [shape: f32[8,64], index: 0, kind: input, shape index: {}]
  %s1 = inlined_call_operand.hbm [shape: f32[8,32], index: 1, kind: input, shape index: {}]
  %s2 = inlined_call_operand.hbm [shape: f32[64,64], index: 2, kind: input, shape index: {}]
  %s3 = inlined_call_operand.vmem [shape: f32[1,64], index: 3, kind: input, shape index: {}]
  %s4 = inlined_call_operand.hbm [shape: f32[32,64], index: 4, kind: input, shape index: {}]
  %s5 = inlined_call_operand.vmem [shape: f32[1,64], index: 5, kind: input, shape index: {}]
  %s6 = inlined_call_operand.hbm [shape: f32[32,64], index: 6, kind: input, shape index: {}]
  %s7 = inlined_call_operand.vmem [shape: f32[1,64], index: 7, kind: input, shape index: {}]
  %s8 = inlined_call_operand.hbm [shape: f32[64,64], index: 8, kind: input, shape index: {}]
  %s9 = inlined_call_operand.hbm [shape: f32[64,64], index: 9, kind: input, shape index: {}]
  %s10 = inlined_call_operand.vmem [shape: f32[1,64], index: 10, kind: input, shape index: {}]
  %s11 = inlined_call_operand.vmem [shape: f32[1,64], index: 11, kind: input, shape index: {}]
  %s12 = inlined_call_operand.<no memory space> [shape: f32[1,1], index: 12, kind: input, shape index: {}]
  %s13 = inlined_call_operand.vmem [shape: f32[8,1], index: 13, kind: output, shape index: {}]
  %s14 = sld [smem:[#allocation0]]
  $region90: #{abstract_quality_classifier.1} parent=0
    _
  %s16 = ssub.s32 1, %s14
  %s17 = scalar_select 0, %s16, %s14
  %v18 = vstv %s12
  %19 = vst [vmem:[#allocation2] sm:$0x1] %v18
  $region1: #{abstract_quality_classifier.1} parent=0
    #allocation3 [shape = 'u8[4096]{0}', space=vmem, size = 0x1000, scoped, tag = 'input window, operand 0, single buffered']
    #allocation4 [shape = 's32[1]{0}', space=sflag, size = 0x4, scoped, tag = 'scoped memory for abstract_quality_classifier.1']
    #allocation5 [shape = 'u8[4096]{0}', space=vmem, size = 0x1000, scoped, tag = 'input window, operand 1, single buffered']
    #allocation6 [shape = 's32[1]{0}', space=sflag, size = 0x4, scoped, tag = 'scoped memory for abstract_quality_classifier.1']
    #allocation7 [shape = 'u8[32768]{0}', space=vmem, size = 0x8000, scoped, tag = 'input window, operand 2, single buffered']
    #allocation8 [shape = 'u8[16384]{0}', space=vmem, size = 0x4000, scoped, tag = 'input window, operand 4, single buffered']
    #allocation9 [shape = 's32[1]{0}', space=sflag, size = 0x4, scoped, tag = 'scoped memory for abstract_quality_classifier.1']
    #allocation10 [shape = 'u8[16384]{0}', space=vmem, size = 0x4000, scoped, tag = 'input window, operand 6, single buffered']
    #allocation11 [shape = 'u8[32768]{0}', space=vmem, size = 0x8000, scoped, tag = 'input window, operand 8, single buffered']
    #allocation12 [shape = 's32[1]{0}', space=sflag, size = 0x4, scoped, tag = 'scoped memory for abstract_quality_classifier.1']
    #allocation13 [shape = 'u8[32768]{0}', space=vmem, size = 0x8000, scoped, tag = 'input window, operand 9, single buffered']
    %20 = vsyncpa [#allocation4], 0
    %21 = vsyncpa [#allocation6], 0
    %22 = vsyncpa [#allocation9], 0
    %23 = vsyncpa [#allocation12], 0
    // Predicated region
    $region2: #{abstract_quality_classifier.1} parent=1 // pred_check
      _
    $region3: #{abstract_quality_classifier.1} parent=1 // pred_check_branch
      %25 = sbr.rel (0) target = $region5
    $region4: #{abstract_quality_classifier.1} parent=1 // pred_region
      %27 = vsyncadd [#allocation4], 0
      %s29 = sshll.u32 %s0, 4
      %s30 = int_to_ptr.hbm [resolvable:$true] %s29
      %s31 = sshll.u32 [#allocation3], 4
      %s32 = int_to_ptr.vmem [resolvable:$true] %s31
      %34 = dma.hbm_to_vmem [thread:$0]  %s30, 128, %s32, [#allocation4]
    $region5: #{abstract_quality_classifier.1} parent=1 // pred_fallthru
      _
    // Predicated region
    $region6: #{abstract_quality_classifier.1} parent=1 // pred_check
      _
    $region7: #{abstract_quality_classifier.1} parent=1 // pred_check_branch
      %36 = sbr.rel (0) target = $region9
    $region8: #{abstract_quality_classifier.1} parent=1 // pred_region
      %38 = vsyncadd [#allocation6], 0
      %s40 = sshll.u32 %s1, 4
      %s41 = int_to_ptr.hbm [resolvable:$true] %s40
      %s42 = sshll.u32 [#allocation5], 4
      %s43 = int_to_ptr.vmem [resolvable:$true] %s42
      %45 = dma.hbm_to_vmem [thread:$0]  %s41, 128, %s43, [#allocation6]
    $region9: #{abstract_quality_classifier.1} parent=1 // pred_fallthru
      _
    // Predicated region
    $region10: #{abstract_quality_classifier.1} parent=1 // pred_check
      _
    $region11: #{abstract_quality_classifier.1} parent=1 // pred_check_branch
      %47 = sbr.rel (0) target = $region13
    $region12: #{abstract_quality_classifier.1} parent=1 // pred_region
      %49 = vsyncadd [#allocation6], 0
      %s50 = sshll.u32 %s2, 4
      %s51 = int_to_ptr.hbm [resolvable:$true] %s50
      %s52 = sshll.u32 [#allocation7], 4
      %s53 = int_to_ptr.vmem [resolvable:$true] %s52
      %58 = dma.hbm_to_vmem [thread:$0]  %s51, 1024, %s53, [#allocation6], 128, 128, 8
    $region13: #{abstract_quality_classifier.1} parent=1 // pred_fallthru
      _
    // Predicated region
    $region14: #{abstract_quality_classifier.1} parent=1 // pred_check
      _
    $region15: #{abstract_quality_classifier.1} parent=1 // pred_check_branch
      %60 = sbr.rel (0) target = $region17
    $region16: #{abstract_quality_classifier.1} parent=1 // pred_region
      _
    $region17: #{abstract_quality_classifier.1} parent=1 // pred_fallthru
      _
    // Predicated region
    $region18: #{abstract_quality_classifier.1} parent=1 // pred_check
      _
    $region19: #{abstract_quality_classifier.1} parent=1 // pred_check_branch
      %62 = sbr.rel (0) target = $region21
    $region20: #{abstract_quality_classifier.1} parent=1 // pred_region
      %64 = vsyncadd [#allocation9], 0
      %s65 = sshll.u32 %s4, 4
      %s66 = int_to_ptr.hbm [resolvable:$true] %s65
      %s67 = sshll.u32 [#allocation8], 4
      %s68 = int_to_ptr.vmem [resolvable:$true] %s67
      %73 = dma.hbm_to_vmem [thread:$0]  %s66, 512, %s68, [#allocation9], 128, 128, 8
    $region21: #{abstract_quality_classifier.1} parent=1 // pred_fallthru
      _
    // Predicated region
    $region22: #{abstract_quality_classifier.1} parent=1 // pred_check
      _
    $region23: #{abstract_quality_classifier.1} parent=1 // pred_check_branch
      %75 = sbr.rel (0) target = $region25
    $region24: #{abstract_quality_classifier.1} parent=1 // pred_region
      _
    $region25: #{abstract_quality_classifier.1} parent=1 // pred_fallthru
      _
    // Predicated region
    $region26: #{abstract_quality_classifier.1} parent=1 // pred_check
      _
    $region27: #{abstract_quality_classifier.1} parent=1 // pred_check_branch
      %77 = sbr.rel (0) target = $region29
    $region28: #{abstract_quality_classifier.1} parent=1 // pred_region
      %79 = vsyncadd [#allocation9], 0
      %s80 = sshll.u32 %s6, 4
      %s81 = int_to_ptr.hbm [resolvable:$true] %s80
      %s82 = sshll.u32 [#allocation10], 4
      %s83 = int_to_ptr.vmem [resolvable:$true] %s82
      %88 = dma.hbm_to_vmem [thread:$0]  %s81, 512, %s83, [#allocation9], 128, 128, 8
    $region29: #{abstract_quality_classifier.1} parent=1 // pred_fallthru
      _
    // Predicated region
    $region30: #{abstract_quality_classifier.1} parent=1 // pred_check
      _
    $region31: #{abstract_quality_classifier.1} parent=1 // pred_check_branch
      %90 = sbr.rel (0) target = $region33
    $region32: #{abstract_quality_classifier.1} parent=1 // pred_region
      _
    $region33: #{abstract_quality_classifier.1} parent=1 // pred_fallthru
      _
    // Predicated region
    $region34: #{abstract_quality_classifier.1} parent=1 // pred_check
      _
    $region35: #{abstract_quality_classifier.1} parent=1 // pred_check_branch
      %92 = sbr.rel (0) target = $region37
    $region36: #{abstract_quality_classifier.1} parent=1 // pred_region
      %94 = vsyncadd [#allocation12], 0
      %s95 = sshll.u32 %s8, 4
      %s96 = int_to_ptr.hbm [resolvable:$true] %s95
      %s97 = sshll.u32 [#allocation11], 4
      %s98 = int_to_ptr.vmem [resolvable:$true] %s97
      %103 = dma.hbm_to_vmem [thread:$0]  %s96, 1024, %s98, [#allocation12], 128, 128, 8
    $region37: #{abstract_quality_classifier.1} parent=1 // pred_fallthru
      _
    // Predicated region
    $region38: #{abstract_quality_classifier.1} parent=1 // pred_check
      _
    $region39: #{abstract_quality_classifier.1} parent=1 // pred_check_branch
      %105 = sbr.rel (0) target = $region41
    $region40: #{abstract_quality_classifier.1} parent=1 // pred_region
      %107 = vsyncadd [#allocation12], 0
      %s108 = sshll.u32 %s9, 4
      %s109 = int_to_ptr.hbm [resolvable:$true] %s108
      %s110 = sshll.u32 [#allocation13], 4
      %s111 = int_to_ptr.vmem [resolvable:$true] %s110
      %116 = dma.hbm_to_vmem [thread:$0]  %s109, 1024, %s111, [#allocation12], 128, 128, 8
    $region41: #{abstract_quality_classifier.1} parent=1 // pred_fallthru
      _
    // Predicated region
    $region42: #{abstract_quality_classifier.1} parent=1 // pred_check
      _
    $region43: #{abstract_quality_classifier.1} parent=1 // pred_check_branch
      %118 = sbr.rel (0) target = $region45
    $region44: #{abstract_quality_classifier.1} parent=1 // pred_region
      _
    $region45: #{abstract_quality_classifier.1} parent=1 // pred_fallthru
      _
    // Predicated region
    $region46: #{abstract_quality_classifier.1} parent=1 // pred_check
      _
    $region47: #{abstract_quality_classifier.1} parent=1 // pred_check_branch
      %120 = sbr.rel (0) target = $region49
    $region48: #{abstract_quality_classifier.1} parent=1 // pred_region
      _
    $region49: #{abstract_quality_classifier.1} parent=1 // pred_fallthru
      _
    // Predicated region
    $region50: #{abstract_quality_classifier.1} parent=1 // pred_check
      _
    $region51: #{abstract_quality_classifier.1} parent=1 // pred_check_branch
      %122 = sbr.rel (0) target = $region53
    $region52: #{abstract_quality_classifier.1} parent=1 // pred_region
      _
    $region53: #{abstract_quality_classifier.1} parent=1 // pred_fallthru
      _
    // Predicated region
    $region54: #{abstract_quality_classifier.1} parent=1 // pred_check
      _
    $region55: #{abstract_quality_classifier.1} parent=1 // pred_check_branch
      %124 = sbr.rel (0) target = $region57
    $region56: #{abstract_quality_classifier.1} parent=1 // pred_region
      %126 = dma.done [#allocation4], 128
    $region57: #{abstract_quality_classifier.1} parent=1 // pred_fallthru
      _
    // Predicated region
    $region58: #{abstract_quality_classifier.1} parent=1 // pred_check
      _
    $region59: #{abstract_quality_classifier.1} parent=1 // pred_check_branch
      %128 = sbr.rel (0) target = $region61
    $region60: #{abstract_quality_classifier.1} parent=1 // pred_region
      %130 = dma.done [#allocation6], 128
    $region61: #{abstract_quality_classifier.1} parent=1 // pred_fallthru
      _
    // Predicated region
    $region62: #{abstract_quality_classifier.1} parent=1 // pred_check
      _
    $region63: #{abstract_quality_classifier.1} parent=1 // pred_check_branch
      %132 = sbr.rel (0) target = $region65
    $region64: #{abstract_quality_classifier.1} parent=1 // pred_region
      %134 = dma.done [#allocation6], 1024
    $region65: #{abstract_quality_classifier.1} parent=1 // pred_fallthru
      _
    // Predicated region
    $region66: #{abstract_quality_classifier.1} parent=1 // pred_check
      _
    $region67: #{abstract_quality_classifier.1} parent=1 // pred_check_branch
      %136 = sbr.rel (0) target = $region69
    $region68: #{abstract_quality_classifier.1} parent=1 // pred_region
      %138 = dma.done [#allocation9], 512
    $region69: #{abstract_quality_classifier.1} parent=1 // pred_fallthru
      _
    // Predicated region
    $region70: #{abstract_quality_classifier.1} parent=1 // pred_check
      _
    $region71: #{abstract_quality_classifier.1} parent=1 // pred_check_branch
      %140 = sbr.rel (0) target = $region73
    $region72: #{abstract_quality_classifier.1} parent=1 // pred_region
      %142 = dma.done [#allocation9], 512
    $region73: #{abstract_quality_classifier.1} parent=1 // pred_fallthru
      _
    // Predicated region
    $region74: #{abstract_quality_classifier.1} parent=1 // pred_check
      _
    $region75: #{abstract_quality_classifier.1} parent=1 // pred_check_branch
      %144 = sbr.rel (0) target = $region77
    $region76: #{abstract_quality_classifier.1} parent=1 // pred_region
      %146 = dma.done [#allocation12], 1024
    $region77: #{abstract_quality_classifier.1} parent=1 // pred_fallthru
      _
    // Predicated region
    $region78: #{abstract_quality_classifier.1} parent=1 // pred_check
      _
    $region79: #{abstract_quality_classifier.1} parent=1 // pred_check_branch
      %148 = sbr.rel (0) target = $region81
    $region80: #{abstract_quality_classifier.1} parent=1 // pred_region
      %150 = dma.done [#allocation12], 1024
    $region81: #{abstract_quality_classifier.1} parent=1 // pred_fallthru
      _
    %v151 = vld [vmem:[#allocation3] sm:$0xff]
    %v152 = vld [vmem:[#allocation5] sm:$0xff]
    %vm153 = vcmask 523264
    %v154 = vsel %vm153, %v151, 0.0
    %155 = vadd.xlane.f32.xlu0 %v154
    %v156 = vpop.xlane.xlu0 %155
    %v157 = vrcp.pop 64.0
    %v158 = vmul.f32 64.0, %v157
    %v159 = vsub.f32 1.0, %v158
    %v160 = vmul.f32 %v157, %v159
    %v161 = vadd.f32 %v157, %v160
    %vm162 = vweird.f32 %v157
    %v163 = vsel %vm162, %v157, %v161
    %v164 = vmul.f32 %v156, %v163
    %v165 = vsub.f32 %v151, %v164
    %v166 = vmul.f32 %v165, %v165
    %v167 = vsel %vm153, %v166, 0.0
    %168 = vadd.xlane.f32.xlu0 %v167
    %v169 = vpop.xlane.xlu0 %168
    %v170 = vmul.f32 %v169, %v163
    %v171 = vadd.f32 %v170, 1e-05
    %v172 = vrsqrt.pop %v171
    %v173 = vmul.f32 %v172, %v171
    %v174 = vmul.f32 %v173, %v172
    %v175 = vmul.f32 0.5, %v174
    %v176 = vsub.f32 1.5, %v175
    %v177 = vmul.f32 %v172, %v176
    %vm178 = vweird.f32 %v171
    %vm179 = vweird.f32 %v172
    %vm180 = vmor %vm178, %vm179
    %v181 = vsel %vm180, %v172, %v177
    %v182 = vmul.f32 %v165, %v181
    %vm183 = vcmask 261120
    %v184 = vsel %vm183, %v152, 0.0
    %185 = vadd.xlane.f32.xlu0 %v184
    %v186 = vpop.xlane.xlu0 %185
    %v187 = vrcp.pop 32.0
    %v188 = vmul.f32 32.0, %v187
    %v189 = vsub.f32 1.0, %v188
    %v190 = vmul.f32 %v187, %v189
    %v191 = vadd.f32 %v187, %v190
    %vm192 = vweird.f32 %v187
    %v193 = vsel %vm192, %v187, %v191
    %v194 = vmul.f32 %v186, %v193
    %v195 = vsub.f32 %v152, %v194
    %v196 = vmul.f32 %v195, %v195
    %v197 = vsel %vm183, %v196, 0.0
    %198 = vadd.xlane.f32.xlu0 %v197
    %v199 = vpop.xlane.xlu0 %198
    %v200 = vmul.f32 %v199, %v193
    %v201 = vadd.f32 %v200, 1e-05
    %v202 = vrsqrt.pop %v201
    %v203 = vmul.f32 %v202, %v201
    %v204 = vmul.f32 %v203, %v202
    %v205 = vmul.f32 0.5, %v204
    %v206 = vsub.f32 1.5, %v205
    %v207 = vmul.f32 %v202, %v206
    %vm208 = vweird.f32 %v201
    %vm209 = vweird.f32 %v202
    %vm210 = vmor %vm208, %vm209
    %v211 = vsel %vm210, %v202, %v207
    %v212 = vmul.f32 %v195, %v211
    %v213 = vld [vmem:[#allocation7] sm:$0xff]
    %v214 = vld [vmem:[#allocation7 + $0x8] sm:$0xff]
    %v215 = vld [vmem:[#allocation7 + $0x10] sm:$0xff]
    %v216 = vld [vmem:[#allocation7 + $0x18] sm:$0xff]
    %v217 = vld [vmem:[#allocation7 + $0x20] sm:$0xff]
    %v218 = vld [vmem:[#allocation7 + $0x28] sm:$0xff]
    %v219 = vld [vmem:[#allocation7 + $0x30] sm:$0xff]
    %v220 = vld [vmem:[#allocation7 + $0x38] sm:$0xff]
    %v221 = vld [vmem:[%s3] sm:$0x1]
    %v223 = vperm.slane %v221, 0
    %v226 = vsel %vm153, %v182, 0
    %228 = vmatpush.msra.mxu0 0.0
    %229 = vmatpush.msra.mxu0 0.0
    %230 = vmatpush.msra.mxu0 0.0
    %231 = vmatpush.msra.mxu0 0.0
    %232 = vmatpush.msra.mxu0 0.0
    %233 = vmatpush.msra.mxu0 0.0
    %234 = vmatpush.msra.mxu0 0.0
    %235 = vmatpush.msra.mxu0 0.0
    %236 = vmatpush.msra.mxu0 %v220
    %237 = vmatpush.msra.mxu0 %v219
    %238 = vmatpush.msra.mxu0 %v218
    %239 = vmatpush.msra.mxu0 %v217
    %240 = vmatpush.msra.mxu0 %v216
    %241 = vmatpush.msra.mxu0 %v215
    %242 = vmatpush.msra.mxu0 %v214
    %243 = vmatpush.msra.mxu0 %v213
    %244 = vmatmul.f32.gmra.mxu0 %v226
    %v245 = vpop.f32.mrf.mxu0
    %v246 = vadd.f32 %v223, %v245
    %247 = vdwg.mxu0
    %v248 = vld [vmem:[#allocation8] sm:$0xff]
    %v249 = vld [vmem:[#allocation8 + $0x8] sm:$0xff]
    %v250 = vld [vmem:[#allocation8 + $0x10] sm:$0xff]
    %v251 = vld [vmem:[#allocation8 + $0x18] sm:$0xff]
    %v252 = vld [vmem:[%s5] sm:$0x1]
    %v254 = vperm.slane %v252, 0
    %v257 = vsel %vm183, %v212, 0
    %259 = vmatpush.msra.mxu0 0.0
    %260 = vmatpush.msra.mxu0 0.0
    %261 = vmatpush.msra.mxu0 0.0
    %262 = vmatpush.msra.mxu0 0.0
    %263 = vmatpush.msra.mxu0 0.0
    %264 = vmatpush.msra.mxu0 0.0
    %265 = vmatpush.msra.mxu0 0.0
    %266 = vmatpush.msra.mxu0 0.0
    %267 = vmatpush.msra.mxu0 0.0
    %268 = vmatpush.msra.mxu0 0.0
    %269 = vmatpush.msra.mxu0 0.0
    %270 = vmatpush.msra.mxu0 0.0
    %271 = vmatpush.msra.mxu0 %v251
    %272 = vmatpush.msra.mxu0 %v250
    %273 = vmatpush.msra.mxu0 %v249
    %274 = vmatpush.msra.mxu0 %v248
    %275 = vmatmul.f32.gmra.mxu0 %v257
    %v276 = vpop.f32.mrf.mxu0
    %v277 = vadd.f32 %v254, %v276
    %278 = vdwg.mxu0
    %v279 = vld [vmem:[#allocation10] sm:$0xff]
    %v280 = vld [vmem:[#allocation10 + $0x8] sm:$0xff]
    %v281 = vld [vmem:[#allocation10 + $0x10] sm:$0xff]
    %v282 = vld [vmem:[#allocation10 + $0x18] sm:$0xff]
    %v283 = vld [vmem:[%s7] sm:$0x1]
    %v285 = vperm.slane %v283, 0
    %287 = vmatpush.msra.mxu0 0.0
    %288 = vmatpush.msra.mxu0 0.0
    %289 = vmatpush.msra.mxu0 0.0
    %290 = vmatpush.msra.mxu0 0.0
    %291 = vmatpush.msra.mxu0 0.0
    %292 = vmatpush.msra.mxu0 0.0
    %293 = vmatpush.msra.mxu0 0.0
    %294 = vmatpush.msra.mxu0 0.0
    %295 = vmatpush.msra.mxu0 0.0
    %296 = vmatpush.msra.mxu0 0.0
    %297 = vmatpush.msra.mxu0 0.0
    %298 = vmatpush.msra.mxu0 0.0
    %299 = vmatpush.msra.mxu0 %v282
    %300 = vmatpush.msra.mxu0 %v281
    %301 = vmatpush.msra.mxu0 %v280
    %302 = vmatpush.msra.mxu0 %v279
    %303 = vmatmul.f32.gmra.mxu0 %v257
    %v304 = vpop.f32.mrf.mxu0
    %v305 = vadd.f32 %v285, %v304
    %306 = vdwg.mxu0
    %v307 = vmul.f32 %v246, %v277
    %v308 = vxor.u32 %v307, 2147483648
    %v309 = vmul.f32 %v308, 1.442695
    %v310 = vpow.pop %v309
    %v311 = vadd.f32 %v310, 1.0
    %v312 = vrcp.pop %v311
    %v313 = vmul.f32 %v311, %v312
    %v314 = vsub.f32 1.0, %v313
    %v315 = vmul.f32 %v312, %v314
    %v316 = vadd.f32 %v312, %v315
    %vm317 = vweird.f32 %v311
    %vm318 = vweird.f32 %v312
    %vm319 = vmor %vm317, %vm318
    %v320 = vsel %vm319, %v312, %v316
    %v321 = vand.u32 2147483647, %v311
    %vm322 = vcmp.eq.f32.partialorder %v321, 8.507059e+37
    %v323 = vand.u32 %v311, 2147483648
    %v324 = vor.u32 1.1754944e-38, %v323
    %v325 = vsel %vm322, %v324, %v320
    %v326 = vmul.f32 1.0, %v325
    %v327 = vmul.f32 %v326, %v305
    %v328 = vsel %vm153, %v327, 0.0
    %329 = vadd.xlane.f32.xlu0 %v328
    %v330 = vpop.xlane.xlu0 %329
    %v331 = vadd.f32 %v156, %v330
    %v332 = vrcp.pop 128.0
    %v333 = vmul.f32 128.0, %v332
    %v334 = vsub.f32 1.0, %v333
    %v335 = vmul.f32 %v332, %v334
    %v336 = vadd.f32 %v332, %v335
    %vm337 = vweird.f32 %v332
    %v338 = vsel %vm337, %v332, %v336
    %v339 = vmul.f32 %v331, %v338
    %v340 = vsub.f32 %v151, %v339
    %v341 = vsub.f32 %v327, %v339
    %v342 = vmul.f32 %v340, %v340
    %v343 = vsel %vm153, %v342, 0.0
    %344 = vadd.xlane.f32.xlu0 %v343
    %v345 = vpop.xlane.xlu0 %344
    %v346 = vmul.f32 %v341, %v341
    %v347 = vsel %vm153, %v346, 0.0
    %348 = vadd.xlane.f32.xlu0 %v347
    %v349 = vpop.xlane.xlu0 %348
    %v350 = vadd.f32 %v345, %v349
    %v351 = vmul.f32 %v350, %v338
    %v352 = vadd.f32 %v351, 1e-05
    %v353 = vrsqrt.pop %v352
    %v354 = vmul.f32 %v353, %v352
    %v355 = vmul.f32 %v354, %v353
    %v356 = vmul.f32 0.5, %v355
    %v357 = vsub.f32 1.5, %v356
    %v358 = vmul.f32 %v353, %v357
    %vm359 = vweird.f32 %v352
    %vm360 = vweird.f32 %v353
    %vm361 = vmor %vm359, %vm360
    %v362 = vsel %vm361, %v353, %v358
    %v363 = vmul.f32 %v340, %v362
    %v364 = vmul.f32 %v341, %v362
    %v365 = vld [vmem:[#allocation11] sm:$0xff]
    %v366 = vld [vmem:[#allocation11 + $0x8] sm:$0xff]
    %v367 = vld [vmem:[#allocation11 + $0x10] sm:$0xff]
    %v368 = vld [vmem:[#allocation11 + $0x18] sm:$0xff]
    %v369 = vld [vmem:[#allocation11 + $0x20] sm:$0xff]
    %v370 = vld [vmem:[#allocation11 + $0x28] sm:$0xff]
    %v371 = vld [vmem:[#allocation11 + $0x30] sm:$0xff]
    %v372 = vld [vmem:[#allocation11 + $0x38] sm:$0xff]
    %v373 = vld [vmem:[#allocation13] sm:$0xff]
    %v374 = vld [vmem:[#allocation13 + $0x8] sm:$0xff]
    %v375 = vld [vmem:[#allocation13 + $0x10] sm:$0xff]
    %v376 = vld [vmem:[#allocation13 + $0x18] sm:$0xff]
    %v377 = vld [vmem:[#allocation13 + $0x20] sm:$0xff]
    %v378 = vld [vmem:[#allocation13 + $0x28] sm:$0xff]
    %v379 = vld [vmem:[#allocation13 + $0x30] sm:$0xff]
    %v380 = vld [vmem:[#allocation13 + $0x38] sm:$0xff]
    %v382 = vsel %vm153, %v364, 0
    %384 = vmatpush.msra.mxu0 0.0
    %385 = vmatpush.msra.mxu0 0.0
    %386 = vmatpush.msra.mxu0 0.0
    %387 = vmatpush.msra.mxu0 0.0
    %388 = vmatpush.msra.mxu0 0.0
    %389 = vmatpush.msra.mxu0 0.0
    %390 = vmatpush.msra.mxu0 0.0
    %391 = vmatpush.msra.mxu0 0.0
    %392 = vmatpush.msra.mxu0 %v380
    %393 = vmatpush.msra.mxu0 %v379
    %394 = vmatpush.msra.mxu0 %v378
    %395 = vmatpush.msra.mxu0 %v377
    %396 = vmatpush.msra.mxu0 %v376
    %397 = vmatpush.msra.mxu0 %v375
    %398 = vmatpush.msra.mxu0 %v374
    %399 = vmatpush.msra.mxu0 %v373
    %400 = vmatmul.f32.gmra.mxu0 %v382
    %v401 = vpop.f32.mrf.mxu0
    %v402 = vadd.f32 0.0, %v401
    %403 = vdwg.mxu0
    %v405 = vsel %vm153, %v363, 0
    %407 = vmatpush.msra.mxu0 0.0
    %408 = vmatpush.msra.mxu0 0.0
    %409 = vmatpush.msra.mxu0 0.0
    %410 = vmatpush.msra.mxu0 0.0
    %411 = vmatpush.msra.mxu0 0.0
    %412 = vmatpush.msra.mxu0 0.0
    %413 = vmatpush.msra.mxu0 0.0
    %414 = vmatpush.msra.mxu0 0.0
    %415 = vmatpush.msra.mxu0 %v372
    %416 = vmatpush.msra.mxu0 %v371
    %417 = vmatpush.msra.mxu0 %v370
    %418 = vmatpush.msra.mxu0 %v369
    %419 = vmatpush.msra.mxu0 %v368
    %420 = vmatpush.msra.mxu0 %v367
    %421 = vmatpush.msra.mxu0 %v366
    %422 = vmatpush.msra.mxu0 %v365
    %423 = vmatmul.f32.gmra.mxu0 %v405
    %v424 = vpop.f32.mrf.mxu0
    %v425 = vadd.f32 %v402, %v424
    %426 = vdwg.mxu0
    %v427 = vld [vmem:[%s10] sm:$0x1]
    %v429 = vperm.slane %v427, 0
    %v431 = vadd.f32 %v425, %v429
    %v432 = vmax.f32 %v431, 0.0
    %v433 = vld [vmem:[%s11] sm:$0x1]
    %v435 = vperm.slane %v433, 0
    %v437 = vmul.f32 %v432, %v435
    %v438 = vsel %vm153, %v437, 0.0
    %439 = vadd.xlane.f32.xlu0 %v438
    %v440 = vpop.xlane.xlu0 %439
    %v441 = vld [vmem:[#allocation2] sm:$0x1]
    %v443 = vperm.slane %v441, 0
    %v445 = vadd.f32 %v440, %v443
    %vm446 = vcmask 7168
    %447 = vst.msk [vmem:[%s13] sm:$0xff] %vm446, %v445
    // Predicated region
    $region82: #{abstract_quality_classifier.1} parent=1 // pred_check
      _
    $region83: #{abstract_quality_classifier.1} parent=1 // pred_check_branch
      %449 = sbr.rel (0) target = $region85
    $region84: #{abstract_quality_classifier.1} parent=1 // pred_region
      _
    $region85: #{abstract_quality_classifier.1} parent=1 // pred_fallthru
      _
    // Predicated region
    $region86: #{abstract_quality_classifier.1} parent=1 // pred_check
      _
    $region87: #{abstract_quality_classifier.1} parent=1 // pred_check_branch
      %451 = sbr.rel (0) target = $region89
    $region88: #{abstract_quality_classifier.1} parent=1 // pred_region
      _
    $region89: #{abstract_quality_classifier.1} parent=1 // pred_fallthru
      _
    %452 = vsyncpa [#allocation4], 1
    %453 = vsyncpa [#allocation6], 1
    %454 = vsyncpa [#allocation9], 1
    %455 = vsyncpa [#allocation12], 1

</llo_original>
